<compile_context>
chip_gen: v7x
topology: tpu7x:2x2x1
jax: 0.10.0
libtpu: 0.0.40
codegen_flags: <defaults>
</compile_context>

<pallas_src>
import math

import jax
import jax.numpy as jnp
from jax.experimental import pallas as pl
from jax.experimental.pallas import tpu as pltpu

# ---- constants from the module ----------------------------------------------
MAX_ALPHA = 1.0
LOG_ALPHA_MAX = math.log(MAX_ALPHA - 1e-06)
C1 = 1.16145124
C2 = -1.50204118
C3 = 0.58629921
SQRT3 = math.sqrt(3.0)


# -----------------------------------------------------------------------------
# In-kernel standard-normal generation (TPU-only path)
# -----------------------------------------------------------------------------
def _uniform_from_bits(bits_u32, shift):
    """16-bit slice of a u32 draw -> f32 uniform in [0, 1). Pure VPU ops."""
    h = (bits_u32 >> shift) & jnp.uint32(0xFFFF)
    return h.astype(jnp.float32) * jnp.float32(1.0 / 65536.0)


def _standard_normal(shape):
    """N(0,1) draw from the (already seeded) stateful HW PRNG.

    Prefers the hardware `stateful_normal`.  Fallback is an Irwin-Hall
    sum-of-4-uniforms (two u32 draws, hi/lo 16 bits each): mean 0, std 1
    exactly after shift/scale, and only adds/muls on the VPU (no log/sqrt/cos),
    so the kernel stays HBM-bound even on v7x's 3.2 TB/s pipe.
    """
    if hasattr(pltpu, "stateful_normal"):
        return pltpu.stateful_normal(shape, jnp.float32)
    b1 = pltpu.prng_random_bits(shape)
    b2 = pltpu.prng_random_bits(shape)
    if b1.dtype != jnp.uint32:
        b1 = pltpu.bitcast(b1, jnp.uint32)
        b2 = pltpu.bitcast(b2, jnp.uint32)
    s = (_uniform_from_bits(b1, 0) + _uniform_from_bits(b1, 16)
         + _uniform_from_bits(b2, 0) + _uniform_from_bits(b2, 16))
    # Irwin-Hall(4): mean 2, var 1/3 -> standardize.  (Approximate normal:
    # tails truncated at ~3.46 sigma -- fine for dropout noise.)
    return (s - 2.0) * jnp.float32(SQRT3)


# -----------------------------------------------------------------------------
# Kernels
# -----------------------------------------------------------------------------
def _gauss_dropout_prng_kernel(seed_ref, x_ref, log_alpha_ref, out_ref):
    """TPU path: noise drawn in-kernel from the HW PRNG."""
    # Independent, deterministic stream per batch tile (and per TC shard on
    # v7x): mix the user seed and the tile index as two separate seed words.
    pltpu.prng_seed(seed_ref[0], pl.program_id(0))

    # clamp (max only) + exp on the (1, D) parameter row, once per tile.
    log_alpha = jnp.minimum(log_alpha_ref[...].astype(jnp.float32), LOG_ALPHA_MAX)
    alpha = jnp.exp(log_alpha)                                   # (1, D) f32

    eps = _standard_normal(x_ref.shape)                          # (TB, D) f32
    m = eps * alpha + 1.0                                        # f32, bcast rows

    x = x_ref[...]
    # Multiply in x's dtype (keeps bf16 packed lanes on v6e/v7x; no-op for f32).
    out_ref[...] = (x * m.astype(x.dtype)).astype(out_ref.dtype)


def _gauss_dropout_noise_kernel(x_ref, eps_ref, log_alpha_ref, out_ref):
    """Portable path: noise streamed in as an input (works under interpret)."""
    log_alpha = jnp.minimum(log_alpha_ref[...].astype(jnp.float32), LOG_ALPHA_MAX)
    alpha = jnp.exp(log_alpha)                                   # (1, D) f32
    m = eps_ref[...].astype(jnp.float32) * alpha + 1.0           # (TB, D) f32
    x = x_ref[...]
    out_ref[...] = (x * m.astype(x.dtype)).astype(out_ref.dtype)


# -----------------------------------------------------------------------------
# Tiling
# -----------------------------------------------------------------------------
_VMEM_LIMIT_BYTES = 32 * 1024 * 1024      # safe on v5e/v6e/v7x; << 64 MiB physical
_VMEM_WS_BUDGET = 20 * 1024 * 1024        # double-buffered working-set budget
_MAX_BLOCK_BYTES = 4 * 1024 * 1024        # per-block target (2-8 MiB sweet spot)


def _round_up(x, m):
    return ((x + m - 1) // m) * m


def _pick_block_rows(batch, feat, dtype_bytes, n_streamed_arrays):
    """Byte-budgeted row tile.

    Block bytes ~ min(4 MiB, budget / (2 buffers * n streamed arrays)),
    rounded down to the dtype's sublane multiple (8 for f32, 16 for bf16).
    The last grid tile may be ragged (pl.cdiv handles it).  When the batch is
    large enough we keep >= 2 grid steps so the pipeline double-buffers and
    v7x's two TensorCores both get work.
    """
    sublane = max(8, 32 // max(1, dtype_bytes))
    if batch <= sublane:
        return batch                                  # tiny input: one full tile
    per_block = min(_MAX_BLOCK_BYTES, _VMEM_WS_BUDGET // (2 * n_streamed_arrays))
    rows = per_block // max(1, feat * dtype_bytes)
    rows = max(sublane, (rows // sublane) * sublane)
    # Keep at least two grid steps (pipelining + megacore split on v7x).
    rows = min(rows, _round_up(-(-batch // 2), sublane))
    return min(rows, batch)


# -----------------------------------------------------------------------------
# Wrapper
# -----------------------------------------------------------------------------
def gauss_dropout_forward(x, log_alpha, seed, *, block_rows=None,
                          use_inkernel_prng=None):
    """Training-mode forward. Returns (x * (eps*alpha + 1), kld)."""
    B, D = x.shape
    if use_inkernel_prng is None:
        # The HW PRNG primitives only lower on a real TPU backend.
        use_inkernel_prng = jax.default_backend() == "tpu"

    dtype_bytes = jnp.dtype(x.dtype).itemsize
    n_streamed = 2 if use_inkernel_prng else 3        # (x, out) [+ eps]
    tb = _pick_block_rows(B, D, dtype_bytes, n_streamed) if block_rows is None \
        else block_rows
    grid = (pl.cdiv(B, tb),)

    compiler_params = pltpu.CompilerParams(
        dimension_semantics=("parallel",),            # megacore split on v7x
        vmem_limit_bytes=_VMEM_LIMIT_BYTES,
    )
    out_shape = jax.ShapeDtypeStruct((B, D), x.dtype)

    if use_inkernel_prng:
        seed_arr = jnp.asarray([seed], dtype=jnp.int32)
        out = pl.pallas_call(
            _gauss_dropout_prng_kernel,
            out_shape=out_shape,
            grid_spec=pltpu.PrefetchScalarGridSpec(
                num_scalar_prefetch=1,                # seed lands in SMEM
                grid=grid,
                in_specs=[
                    pl.BlockSpec((tb, D), lambda i, seed_ref: (i, 0)),
                    pl.BlockSpec((1, D), lambda i, seed_ref: (0, 0)),
                ],
                out_specs=pl.BlockSpec((tb, D), lambda i, seed_ref: (i, 0)),
            ),
            compiler_params=compiler_params,
        )(seed_arr, x, log_alpha)
    else:
        eps = jax.random.normal(jax.random.PRNGKey(seed), (B, D), dtype=jnp.float32)
        out = pl.pallas_call(
            _gauss_dropout_noise_kernel,
            out_shape=out_shape,
            grid_spec=pltpu.PrefetchScalarGridSpec(
                num_scalar_prefetch=0,
                grid=grid,
                in_specs=[
                    pl.BlockSpec((tb, D), lambda i: (i, 0)),
                    pl.BlockSpec((tb, D), lambda i: (i, 0)),
                    pl.BlockSpec((1, D), lambda i: (0, 0)),
                ],
                out_specs=pl.BlockSpec((tb, D), lambda i: (i, 0)),
            ),
            compiler_params=compiler_params,
        )(x, eps, log_alpha)

    # KLD (Kingma cubic approx) depends only on the (1, D) parameter row:
    # compute it once here instead of per grid step inside the kernel.
    la = jnp.minimum(log_alpha.astype(jnp.float32), LOG_ALPHA_MAX)
    a = jnp.exp(2.0 * la)
    a2 = a * a
    neg_kl = la + C1 * a + C2 * a2 + C3 * a2 * a
    kld = -jnp.sum(neg_kl)
    return out, kld


# TODO(synk): eval-mode branch of the module (identity pass-through / externally
# supplied `noise`) is trivial and intentionally left out of the kernel.

if __name__ == "__main__":
    # Small shapes consistent with the module's [batch_size, input_size] contract.
    B, D = 16, 256
    p = 0.5

    key = jax.random.PRNGKey(0)
    x = jax.random.normal(key, (B, D), dtype=jnp.float32)

    # Deterministic parameter init per __init__: log_alpha = log(sqrt(p/(1-p))) * ones(1, D)
    init_alpha = math.sqrt(p / (1.0 - p))
    log_alpha = jnp.full((1, D), math.log(init_alpha), dtype=jnp.float32)

    out, kld = gauss_dropout_forward(x, log_alpha, seed=1234)
    out = jax.block_until_ready(out)
    kld = jax.block_until_ready(kld)

    # 1) KLD matches the module's closed-form expression.
    la = jnp.minimum(log_alpha, LOG_ALPHA_MAX)
    a = jnp.exp(2.0 * la)
    ref_kld = -jnp.sum(la + C1 * a + C2 * a * a + C3 * a * a * a)
    assert jnp.allclose(kld, ref_kld, atol=1e-4, rtol=1e-5)

    # 2) Determinism: same seed -> identical output.
    out2, _ = gauss_dropout_forward(x, log_alpha, seed=1234)
    assert jnp.array_equal(out, jax.block_until_ready(out2))

    # 3) Implied noise eps = (out/x - 1)/alpha is finite and ~N(0, 1)
    #    (in-kernel PRNG stream does not bit-match a host randn stream).
    alpha = jnp.exp(la)
    eps = (out / x - 1.0) / alpha
    assert bool(jnp.all(jnp.isfinite(eps)))
    assert abs(float(jnp.mean(eps))) < 0.2
    assert abs(float(jnp.std(eps)) - 1.0) < 0.2

    print("KERNEL_OK")
</pallas_src>

<mosaic_0001>
module attributes {stable_mosaic.version = 11 : i64} {
  func.func @_gauss_dropout_noise_kernel(%arg0: i32, %arg1: memref<8x256xf32, #tpu.memory_space<vmem>>, %arg2: memref<8x256xf32, #tpu.memory_space<vmem>>, %arg3: memref<1x256xf32, #tpu.memory_space<vmem>>, %arg4: memref<8x256xf32, #tpu.memory_space<vmem>>) attributes {dimension_semantics = [#tpu.dimension_semantics<parallel>], iteration_bounds = array<i64: 2>, scalar_prefetch = 0 : i64, scratch_operands = 0 : i64, tpu.core_type = #tpu.core_type<tc>, window_params = [{transform_indices = @transform_0, window_bounds = array<i64: 8, 256>}, {transform_indices = @transform_1, window_bounds = array<i64: 8, 256>}, {pipeline_mode = #tpu.pipeline_mode<synchronous>, transform_indices = @transform_2, window_bounds = array<i64: 1, 256>}, {transform_indices = @transform_3, window_bounds = array<i64: 8, 256>}]} {
    %c0 = arith.constant 0 : index
    %c0_0 = arith.constant 0 : index
    %0 = vector.load %arg3[%c0, %c0_0] : memref<1x256xf32, #tpu.memory_space<vmem>>, vector<1x256xf32>
    %cst = arith.constant -1.00000045E-6 : f32
    %1 = vector.broadcast %cst : f32 to vector<1x256xf32>
    %2 = arith.minimumf %0, %1 : vector<1x256xf32>
    %3 = math.exp %2 : vector<1x256xf32>
    %c0_1 = arith.constant 0 : index
    %c0_2 = arith.constant 0 : index
    %4 = vector.load %arg2[%c0_1, %c0_2] : memref<8x256xf32, #tpu.memory_space<vmem>>, vector<8x256xf32>
    %5 = vector.broadcast %3 : vector<1x256xf32> to vector<8x256xf32>
    %6 = arith.mulf %4, %5 : vector<8x256xf32>
    %cst_3 = arith.constant 1.000000e+00 : f32
    %7 = vector.broadcast %cst_3 : f32 to vector<8x256xf32>
    %8 = arith.addf %6, %7 : vector<8x256xf32>
    %c0_4 = arith.constant 0 : index
    %c0_5 = arith.constant 0 : index
    %9 = vector.load %arg1[%c0_4, %c0_5] : memref<8x256xf32, #tpu.memory_space<vmem>>, vector<8x256xf32>
    %10 = arith.mulf %9, %8 : vector<8x256xf32>
    %c0_6 = arith.constant 0 : index
    %c0_7 = arith.constant 0 : index
    %11 = vector.load %arg4[%c0_6, %c0_7] : memref<8x256xf32, #tpu.memory_space<vmem>>, vector<8x256xf32>
    tpu.vector_store %arg4[%c0_6, %c0_7], %10 {strides = array<i32>} : memref<8x256xf32, #tpu.memory_space<vmem>>, vector<8x256xf32>,
    return
  }
  func.func @transform_0(%arg0: i32) -> (i32, i32) {
    %c0_i32 = arith.constant 0 : i32
    %c0_i32_0 = arith.constant 0 : i32
    return %arg0, %c0_i32 : i32, i32
  }
  func.func @transform_1(%arg0: i32) -> (i32, i32) {
    %c0_i32 = arith.constant 0 : i32
    %c0_i32_0 = arith.constant 0 : i32
    return %arg0, %c0_i32 : i32, i32
  }
  func.func @transform_2(%arg0: i32) -> (i32, i32) {
    %c0_i32 = arith.constant 0 : i32
    %c0_i32_0 = arith.constant 0 : i32
    %c0_i32_1 = arith.constant 0 : i32
    return %c0_i32, %c0_i32_0 : i32, i32
  }
  func.func @transform_3(%arg0: i32) -> (i32, i32) {
    %c0_i32 = arith.constant 0 : i32
    %c0_i32_0 = arith.constant 0 : i32
    return %arg0, %c0_i32 : i32, i32
  }
}

</mosaic_0001>

<llo_original>
// kernel: tpu_custom_call.1
$region0: #{tpu_custom_call.1}
  #allocation0 [shape = 'u32[]', space=smem, size = 0x4, offset = 0x4, fixed_abs, tag = 'smem constant byte address 0x4 - core index']
  #allocation1 [shape = 'u32[144,128]{1,0:T(1,128)}', space=vmem, size = 0x12000, scoped, tag = 'internal scratch']
  %s0 = inlined_call_operand.hbm [shape: f32[16,256], index: 0, kind: input, shape index: {}]
  %s1 = inlined_call_operand.hbm [shape: f32[16,256], index: 1, kind: input, shape index: {}]
  %s2 = inlined_call_operand.vmem [shape: f32[1,256], index: 2, kind: input, shape index: {}]
  %s3 = inlined_call_operand.hbm [shape: f32[16,256], index: 3, kind: output, shape index: {}]
  %s4 = sld [smem:[#allocation0]]
  $region53: #{tpu_custom_call.1} parent=0
    _
  %s6 = ssub.s32 1, %s4
  %s7 = scalar_select 0, %s6, %s4
  $region1: #{tpu_custom_call.1} parent=0
    #allocation2 [shape = 'u8[16384]{0}', space=vmem, size = 0x4000, scoped, tag = 'input window, operand 0']
    #allocation3 [shape = 's32[2]{0}', space=sflag, size = 0x8, scoped, tag = 'scoped memory for tpu_custom_call.1']
    #allocation4 [shape = 's32[2]{0}', space=sflag, size = 0x8, scoped, tag = 'scoped memory for tpu_custom_call.1']
    #allocation5 [shape = 'u8[16384]{0}', space=vmem, size = 0x4000, scoped, tag = 'input window, operand 1']
    #allocation6 [shape = 's32[2]{0}', space=sflag, size = 0x8, scoped, tag = 'scoped memory for tpu_custom_call.1']
    #allocation7 [shape = 'u8[16384]{0}', space=vmem, size = 0x4000, scoped, tag = 'output window, operand 0']
    %8 = vsyncpa [#allocation3], 0
    %s9 = scalar_lea.sflag [#allocation3], 1
    %10 = vsyncpa %s9, 0
    %11 = vsyncpa [#allocation6], 0
    %s12 = scalar_lea.sflag [#allocation6], 1
    %13 = vsyncpa %s12, 0
    %14 = vsyncpa [#allocation4], 0
    %s15 = scalar_lea.sflag [#allocation4], 1
    %16 = vsyncpa %s15, 0
    loop: start=0, step=1, limit=4
    $region2: #{tpu_custom_call.1} parent=1 // loop_pre_header
      _
    $region3: #{tpu_custom_call.1} parent=1 // loop_header
      %s18 = sphi 0, %s22
      %p19 = scmp.ge.s32.totalorder %s18, 4
      %s28 = sphi 0, %s30
      %s31 = sphi 0, %s28
      %s32 = sphi 0, %s31
      %s48 = sphi 0, %s32
      %s54 = sphi 0, %s56
      %s57 = sphi 0, %s54
      %s58 = sphi 0, %s57
      %s74 = sphi 0, %s58
      %s78 = sphi 0, %s78
      %s80 = sphi 0, %s78
      %s81 = sphi 0, %s80
      %s95 = sphi 0, %s81
      %s101 = sphi 0, %s103
      %s104 = sphi 0, %s101
      %s105 = sphi 0, %s104
      %s121 = sphi 0, %s105
    $region4: #{tpu_custom_call.1} parent=1 // loop_header_branch
      %21 = sbr.rel (%p19) target = $region8
    $region5: #{tpu_custom_call.1} parent=1 // loop_body
      %s23 = ssub.s32 %s18, 1
      %s24 = ssub.s32 %s18, 2
      %s25 = sadd.s32 %s18, 1
      %s26 = ssub.s32 %s18, %s25
      %p27 = scmp.eq.s32.totalorder %s26, 0
      %s29 = sadd.s32 %s28, 1
      %s30 = scalar_select %p27, %s28, %s29
      %p33 = pneg %p27
      %p34 = scmp.eq.s32.totalorder %s18, 1
      %p35 = por %p33, %p34
      %p36 = scmp.ne.s32.totalorder %s28, %s31
      %p37 = scmp.eq.s32.totalorder %s18, 0
      %p38 = por %p36, %p37
      %p39 = scmp.ne.s32.totalorder %s28, %s31
      %p40 = scmp.eq.s32.totalorder %s23, 1
      %p41 = por %p39, %p40
      %p42 = scmp.ne.s32.totalorder %s31, %s32
      %p43 = scmp.eq.s32.totalorder %s23, 0
      %p44 = por %p42, %p43
      %p45 = scmp.ne.s32.totalorder %s31, %s32
      %p46 = scmp.eq.s32.totalorder %s24, 1
      %p47 = por %p45, %p46
      %p49 = scmp.ne.s32.totalorder %s32, %s48
      %p50 = scmp.eq.s32.totalorder %s24, 0
      %p51 = por %p49, %p50
      %s52 = ssub.s32 %s18, %s25
      %p53 = scmp.eq.s32.totalorder %s52, 0
      %s55 = sadd.s32 %s54, 1
      %s56 = scalar_select %p53, %s54, %s55
      %p59 = pneg %p53
      %p60 = scmp.eq.s32.totalorder %s18, 1
      %p61 = por %p59, %p60
      %p62 = scmp.ne.s32.totalorder %s54, %s57
      %p63 = scmp.eq.s32.totalorder %s18, 0
      %p64 = por %p62, %p63
      %p65 = scmp.ne.s32.totalorder %s54, %s57
      %p66 = scmp.eq.s32.totalorder %s23, 1
      %p67 = por %p65, %p66
      %p68 = scmp.ne.s32.totalorder %s57, %s58
      %p69 = scmp.eq.s32.totalorder %s23, 0
      %p70 = por %p68, %p69
      %p71 = scmp.ne.s32.totalorder %s57, %s58
      %p72 = scmp.eq.s32.totalorder %s24, 1
      %p73 = por %p71, %p72
      %p75 = scmp.ne.s32.totalorder %s58, %s74
      %p76 = scmp.eq.s32.totalorder %s24, 0
      %p77 = por %p75, %p76
      %s79 = sadd.s32 %s78, 1
      %p82 = scmp.eq.s32.totalorder %s18, 1
      %p83 = scmp.ne.s32.totalorder %s78, %s80
      %p84 = scmp.eq.s32.totalorder %s18, 0
      %p85 = por %p83, %p84
      %p86 = scmp.ne.s32.totalorder %s78, %s80
      %p87 = scmp.eq.s32.totalorder %s23, 1
      %p88 = por %p86, %p87
      %p89 = scmp.ne.s32.totalorder %s80, %s81
      %p90 = scmp.eq.s32.totalorder %s23, 0
      %p91 = por %p89, %p90
      %p92 = scmp.ne.s32.totalorder %s80, %s81
      %p93 = scmp.eq.s32.totalorder %s24, 1
      %p94 = por %p92, %p93
      %p96 = scmp.ne.s32.totalorder %s81, %s95
      %p97 = scmp.eq.s32.totalorder %s24, 0
      %p98 = por %p96, %p97
      %s99 = ssub.s32 %s18, %s25
      %p100 = scmp.eq.s32.totalorder %s99, 0
      %s102 = sadd.s32 %s101, 1
      %s103 = scalar_select %p100, %s101, %s102
      %p106 = pneg %p100
      %p107 = scmp.eq.s32.totalorder %s18, 1
      %p108 = por %p106, %p107
      %p109 = scmp.ne.s32.totalorder %s101, %s104
      %p110 = scmp.eq.s32.totalorder %s18, 0
      %p111 = por %p109, %p110
      %p112 = scmp.ne.s32.totalorder %s101, %s104
      %p113 = scmp.eq.s32.totalorder %s23, 1
      %p114 = por %p112, %p113
      %p115 = scmp.ne.s32.totalorder %s104, %s105
      %p116 = scmp.eq.s32.totalorder %s23, 0
      %p117 = por %p115, %p116
      %p118 = scmp.ne.s32.totalorder %s104, %s105
      %p119 = scmp.eq.s32.totalorder %s24, 1
      %p120 = por %p118, %p119
      %p122 = scmp.ne.s32.totalorder %s105, %s121
      %p123 = scmp.eq.s32.totalorder %s24, 0
      %p124 = por %p122, %p123
      %p125 = scmp.le.s32.totalorder 1, %s18
      %p126 = scmp.lt.s32.totalorder %s18, 3
      %p127 = pnand %p125, %p126
      %p128 = pneg %p127
      // Predicated region
      $region9: #{tpu_custom_call.1} parent=5 // pred_check
        _
      $region10: #{tpu_custom_call.1} parent=5 // pred_check_branch
        %130 = sbr.rel (%p127) target = $region12
      $region11: #{tpu_custom_call.1} parent=5 // pred_region
        %s131 = ssub.s32 %s18, 1
        // Predicated region
        $region13: #{tpu_custom_call.1} parent=11 // pred_check
          %p132 = pneg %p91
        $region14: #{tpu_custom_call.1} parent=11 // pred_check_branch
          %134 = sbr.rel (%p132) target = $region16
        $region15: #{tpu_custom_call.1} parent=11 // pred_region
          _
        $region16: #{tpu_custom_call.1} parent=11 // pred_fallthru
          _
      $region12: #{tpu_custom_call.1} parent=5 // pred_fallthru
        _
      %p135 = scmp.lt.s32.totalorder %s18, 2
      // Predicated region
      $region17: #{tpu_custom_call.1} parent=5 // pred_check
        %p136 = pneg %p135
      $region18: #{tpu_custom_call.1} parent=5 // pred_check_branch
        %138 = sbr.rel (%p136) target = $region20
      $region19: #{tpu_custom_call.1} parent=5 // pred_region
        // Predicated region
        $region21: #{tpu_custom_call.1} parent=19 // pred_check
          %p139 = pneg %p38
        $region22: #{tpu_custom_call.1} parent=19 // pred_check_branch
          %141 = sbr.rel (%p139) target = $region24
        $region23: #{tpu_custom_call.1} parent=19 // pred_region
          %s142 = sand.u32 %s28, 1
          %s143 = scalar_lea.sflag [#allocation3], %s142
          %s144 = sand.u32 %s28, 1
          %s145 = smul.addr %s144, 16
          %s146 = scalar_lea.vmem [#allocation2], %s145
          %s148 = ssub.s32 256, 256
          %149 = vsyncadd %s143, %s148
          %s150 = smul.addr %s18, 2
          %s151 = smul.addr %s150, 128
          %s152 = scalar_lea.hbm %s0, %s151
          %s154 = sshll.u32 %s146, 4
          %s155 = int_to_ptr.vmem [resolvable:$true] %s154
          %157 = dma.hbm_to_vmem [thread:$0]  %s152, 256, %s155, %s143
        $region24: #{tpu_custom_call.1} parent=19 // pred_fallthru
          _
        // Predicated region
        $region25: #{tpu_custom_call.1} parent=19 // pred_check
          %p158 = pneg %p64
        $region26: #{tpu_custom_call.1} parent=19 // pred_check_branch
          %160 = sbr.rel (%p158) target = $region28
        $region27: #{tpu_custom_call.1} parent=19 // pred_region
          %s161 = sand.u32 %s54, 1
          %s162 = scalar_lea.sflag [#allocation6], %s161
          %s163 = sand.u32 %s54, 1
          %s164 = smul.addr %s163, 16
          %s165 = scalar_lea.vmem [#allocation5], %s164
          %s167 = ssub.s32 256, 256
          %168 = vsyncadd %s162, %s167
          %s169 = smul.addr %s18, 2
          %s170 = smul.addr %s169, 128
          %s171 = scalar_lea.hbm %s1, %s170
          %s173 = sshll.u32 %s165, 4
          %s174 = int_to_ptr.vmem [resolvable:$true] %s173
          %176 = dma.hbm_to_vmem [thread:$0]  %s171, 256, %s174, %s162
        $region28: #{tpu_custom_call.1} parent=19 // pred_fallthru
          _
      $region20: #{tpu_custom_call.1} parent=5 // pred_fallthru
        _
      %p177 = scmp.le.s32.totalorder 1, %s18
      %p178 = scmp.lt.s32.totalorder %s18, 3
      %p179 = pnand %p177, %p178
      %p180 = pneg %p179
      // Predicated region
      $region29: #{tpu_custom_call.1} parent=5 // pred_check
        _
      $region30: #{tpu_custom_call.1} parent=5 // pred_check_branch
        %182 = sbr.rel (%p179) target = $region32
      $region31: #{tpu_custom_call.1} parent=5 // pred_region
        %s183 = ssub.s32 %s18, 1
        %s184 = sand.u32 %s31, 1
        %s185 = scalar_lea.sflag [#allocation3], %s184
        %s186 = sand.u32 %s31, 1
        %s187 = smul.addr %s186, 16
        %s188 = scalar_lea.vmem [#allocation2], %s187
        // Predicated region
        $region33: #{tpu_custom_call.1} parent=31 // pred_check
          %p189 = pneg %p44
        $region34: #{tpu_custom_call.1} parent=31 // pred_check_branch
          %191 = sbr.rel (%p189) target = $region36
        $region35: #{tpu_custom_call.1} parent=31 // pred_region
          %192 = dma.done %s185, 256
        $region36: #{tpu_custom_call.1} parent=31 // pred_fallthru
          _
        %s193 = sand.u32 %s57, 1
        %s194 = scalar_lea.sflag [#allocation6], %s193
        %s195 = sand.u32 %s57, 1
        %s196 = smul.addr %s195, 16
        %s197 = scalar_lea.vmem [#allocation5], %s196
        // Predicated region
        $region37: #{tpu_custom_call.1} parent=31 // pred_check
          %p198 = pneg %p70
        $region38: #{tpu_custom_call.1} parent=31 // pred_check_branch
          %200 = sbr.rel (%p198) target = $region40
        $region39: #{tpu_custom_call.1} parent=31 // pred_region
          %201 = dma.done %s194, 256
        $region40: #{tpu_custom_call.1} parent=31 // pred_fallthru
          _
        %s202 = sand.u32 %s31, 1
        %s203 = scalar_lea.sflag [#allocation3], %s202
        %s204 = sand.u32 %s31, 1
        %s205 = smul.addr %s204, 16
        %s206 = scalar_lea.vmem [#allocation2], %s205
        %p207 = pneg %p44
        %p208 = pneg %p41
        %s209 = sand.u32 %s57, 1
        %s210 = scalar_lea.sflag [#allocation6], %s209
        %s211 = sand.u32 %s57, 1
        %s212 = smul.addr %s211, 16
        %s213 = scalar_lea.vmem [#allocation5], %s212
        %p214 = pneg %p70
        %p215 = pneg %p67
        %p216 = pneg %p91
        %p217 = pneg %p88
        %p218 = pneg %p117
        %p219 = pneg %p114
        %s220 = sand.u32 %s104, 1
        %s221 = scalar_lea.sflag [#allocation4], %s220
        %s222 = sand.u32 %s104, 1
        %s223 = smul.addr %s222, 16
        %s224 = scalar_lea.vmem [#allocation7], %s223
        %v225 = vld [vmem:[%s2] sm:$0x3]
        %v226 = vmin.f32 %v225, -1.0000005e-06
        %v227 = vmul.f32 %v226, 1.442695
        %v228 = vpow.pop %v227
        %v229 = vld [vmem:[%s197] sm:$0xff]
        %v230 = vld [vmem:[%s197 + $0x8] sm:$0xff]
        %v232 = vlaneseq
        %v233 = vshrl.u32 %v232, 7
        %v234 = vsub.s32 0, %v233
        %v235 = vrot.slane %v228, %v234
        %v236 = vlaneseq
        %v237 = vshrl.u32 %v236, 7
        %v238 = vsub.s32 1, %v237
        %v239 = vrot.slane %v228, %v238
        %v242 = vmul.f32 %v229, %v235
        %v243 = vmul.f32 %v230, %v239
        %v244 = vadd.f32 %v242, 1.0
        %v245 = vadd.f32 %v243, 1.0
        %v246 = vld [vmem:[%s188] sm:$0xff]
        %v247 = vld [vmem:[%s188 + $0x8] sm:$0xff]
        %v248 = vmul.f32 %v246, %v244
        %v249 = vmul.f32 %v247, %v245
        %250 = vst [vmem:[%s224] sm:$0xff] %v248
        %251 = vst [vmem:[%s224 + $0x8] sm:$0xff] %v249
        %s252 = sand.u32 %s104, 1
        %s253 = scalar_lea.sflag [#allocation4], %s252
        %s254 = sand.u32 %s104, 1
        %s255 = smul.addr %s254, 16
        %s256 = scalar_lea.vmem [#allocation7], %s255
        // Predicated region
        $region41: #{tpu_custom_call.1} parent=31 // pred_check
          %p257 = pneg %p114
        $region42: #{tpu_custom_call.1} parent=31 // pred_check_branch
          %259 = sbr.rel (%p257) target = $region44
        $region43: #{tpu_custom_call.1} parent=31 // pred_region
          %s261 = ssub.s32 256, 256
          %262 = vsyncadd %s253, %s261
          %s263 = smul.addr %s23, 2
          %s264 = smul.addr %s263, 128
          %s265 = scalar_lea.hbm %s3, %s264
          %s267 = sshll.u32 %s256, 4
          %s268 = int_to_ptr.vmem [resolvable:$true] %s267
          %270 = dma.vmem_to_hbm [thread:$0]  %s268, 256, %s265, %s253
        $region44: #{tpu_custom_call.1} parent=31 // pred_fallthru
          _
      $region32: #{tpu_custom_call.1} parent=5 // pred_fallthru
        _
      %p271 = scmp.le.s32.totalorder 2, %s18
      // Predicated region
      $region45: #{tpu_custom_call.1} parent=5 // pred_check
        %p272 = pneg %p271
      $region46: #{tpu_custom_call.1} parent=5 // pred_check_branch
        %274 = sbr.rel (%p272) target = $region48
      $region47: #{tpu_custom_call.1} parent=5 // pred_region
        %s275 = ssub.s32 %s18, 2
        // Predicated region
        $region49: #{tpu_custom_call.1} parent=47 // pred_check
          %p276 = pneg %p120
        $region50: #{tpu_custom_call.1} parent=47 // pred_check_branch
          %278 = sbr.rel (%p276) target = $region52
        $region51: #{tpu_custom_call.1} parent=47 // pred_region
          %s279 = sand.u32 %s105, 1
          %s280 = scalar_lea.sflag [#allocation4], %s279
          %s281 = sand.u32 %s105, 1
          %s282 = smul.addr %s281, 16
          %s283 = scalar_lea.vmem [#allocation7], %s282
          %284 = dma.done %s280, 256
        $region52: #{tpu_custom_call.1} parent=47 // pred_fallthru
          _
      $region48: #{tpu_custom_call.1} parent=5 // pred_fallthru
        _
    $region6: #{tpu_custom_call.1} parent=1 // loop_footer
      %s22 = sadd.s32 1, %s18
    $region7: #{tpu_custom_call.1} parent=1 // loop_footer_branch
      %17 = sbr.rel target = $region3
    $region8: #{tpu_custom_call.1} parent=1 // loop_exit
      _
    %285 = vsyncpa [#allocation3], 1
    %s286 = scalar_lea.sflag [#allocation3], 1
    %287 = vsyncpa %s286, 1
    %288 = vsyncpa [#allocation6], 1
    %s289 = scalar_lea.sflag [#allocation6], 1
    %290 = vsyncpa %s289, 1
    %291 = vsyncpa [#allocation4], 1
    %s292 = scalar_lea.sflag [#allocation4], 1
    %293 = vsyncpa %s292, 1

</llo_original>
